<compile_context>
chip_gen: v7x
topology: tpu7x:2x2x1
jax: 0.10.0
libtpu: 0.0.40
codegen_flags: <defaults>
</compile_context>

<pallas_src>
from collections import namedtuple

import jax
import jax.numpy as jnp
from jax.experimental import pallas as pl
from jax.experimental.pallas import tpu as pltpu


def _round_up(v, m):
    return ((v + m - 1) // m) * m


def _num_tensorcores_per_chip():
    """v7x is the only targeted generation with 2 TensorCores per chip."""
    try:
        kind = jax.devices()[0].device_kind.lower()
    except Exception:
        return 1
    return 2 if "v7" in kind else 1


# ----------------------------------------------------------------------------
# Kernel: fused MLP chain, entirely in VMEM.
# ----------------------------------------------------------------------------
def _mlp_kernel(x_ref, *refs):
    """Per layer: h = ReLU(h @ W + b).

    refs = (w1, b1, w2, b2, ..., wL, bL, out_ref).
    Weights are bf16 (MXU inputs); accumulation, bias-add, ReLU are f32.
    """
    out_ref = refs[-1]
    param_refs = refs[:-1]
    n_layers = len(param_refs) // 2

    h = x_ref[...].astype(jnp.float32)
    for layer in range(n_layers):
        w = param_refs[2 * layer][...]
        b = param_refs[2 * layer + 1][...]            # (1, D_out) -> broadcasts
        acc = jnp.dot(h.astype(w.dtype), w, preferred_element_type=jnp.float32)
        h = jnp.maximum(acc + b, 0.0)                 # ReLU after every Linear
    out_ref[...] = h.astype(out_ref.dtype)


# ----------------------------------------------------------------------------
# One-time parameter preparation (padding + casting hoisted out of the call).
# ----------------------------------------------------------------------------
PreparedParams = namedtuple("PreparedParams", ["flat", "dims", "pdims"])


def prepare_params(params, compute_dtype=jnp.bfloat16):
    """Pad output feature dims to multiples of 128, cast weights to bf16, once.

    params: list of (W [D_in, D_out] f32, b [1, D_out] f32) for every layer
            (W is torch weight.T), including the final latent projection.

    The input feature dim (dims[0]) is intentionally NOT padded: x stays
    [B, d_in] in HBM and the first weight keeps K = d_in. Padded weight rows /
    cols and biases are zero, so padded lanes stay 0 through every ReLU.
    """
    dims = [params[0][0].shape[0]] + [w.shape[1] for w, _ in params]
    pdims = [dims[0]] + [_round_up(d, 128) for d in dims[1:]]

    flat = []
    for li, (w, b) in enumerate(params):
        wp = (jnp.zeros((pdims[li], pdims[li + 1]), compute_dtype)
              .at[:dims[li], :dims[li + 1]].set(w.astype(compute_dtype)))
        bp = (jnp.zeros((1, pdims[li + 1]), jnp.float32)
              .at[:, :dims[li + 1]].set(b.astype(jnp.float32)))
        flat.extend([wp, bp])
    return PreparedParams(flat=flat, dims=dims, pdims=pdims)


# ----------------------------------------------------------------------------
# Forward wrapper.
# ----------------------------------------------------------------------------
def cond_variational_embedding(x, prepped, *, batch_tile=None,
                               out_dtype=jnp.float32, return_padded=False):
    """Fused CondVariationalEmbedding forward.

    x:       [B, encoder_dims[0]] float32
    prepped: PreparedParams from prepare_params() (built once, reused per call).
    """
    B, d_in = x.shape
    dims, pdims, flat_params = prepped.dims, prepped.pdims, prepped.flat
    if d_in != dims[0]:
        raise ValueError(f"x feature dim {d_in} != expected {dims[0]}")
    latent_dim = dims[-1]
    n_layers = len(flat_params) // 2

    # --- batch tile: generation-aware -----------------------------------------
    n_cores = _num_tensorcores_per_chip()
    if batch_tile is None:
        batch_tile = min(1024, _round_up(B, 8))          # 1 TC: one big step
        if n_cores >= 2 and B >= 16:                     # 2 TC (v7x): split so the
            batch_tile = min(batch_tile,                 # parallel axis shards
                             _round_up(pl.cdiv(B, n_cores), 8))
    if batch_tile % 8 != 0:
        raise ValueError(f"batch_tile must be a multiple of 8, got {batch_tile}")
    Bp = _round_up(B, batch_tile)

    # --- pad only the batch dim of x (feature dim stays d_in, lane = full dim) -
    xp = x if Bp == B else jnp.zeros((Bp, d_in), x.dtype).at[:B].set(x)

    in_specs = [pl.BlockSpec((batch_tile, d_in), lambda i: (i, 0))]
    for p in flat_params:                                # full-block, resident
        in_specs.append(pl.BlockSpec(p.shape, lambda i: (0, 0)))
    out_spec = pl.BlockSpec((batch_tile, pdims[-1]), lambda i: (i, 0))

    # --- advisory cost estimate ------------------------------------------------
    flops = 2 * Bp * sum(pdims[i] * pdims[i + 1] for i in range(n_layers))
    p_bytes = sum(int(p.size) * jnp.dtype(p.dtype).itemsize for p in flat_params)
    out_itemsize = jnp.dtype(out_dtype).itemsize
    bytes_accessed = int(xp.size) * 4 + p_bytes + Bp * pdims[-1] * out_itemsize
    cost = pl.CostEstimate(flops=flops, transcendentals=0,
                           bytes_accessed=bytes_accessed)

    # --- VMEM estimate; only override the scoped default when we actually grow -
    est_vmem = (2 * batch_tile * d_in * 4                    # x double-buffer
                + 2 * batch_tile * pdims[-1] * out_itemsize  # out double-buffer
                + 2 * p_bytes                                # resident params
                + 4 * batch_tile * max(pdims) * 4)           # live activations
    compiler_kwargs = dict(dimension_semantics=("parallel",))
    if est_vmem > (16 << 20):
        compiler_kwargs["vmem_limit_bytes"] = min(2 * est_vmem, 64 << 20)

    out = pl.pallas_call(
        _mlp_kernel,
        out_shape=jax.ShapeDtypeStruct((Bp, pdims[-1]), out_dtype),
        grid_spec=pltpu.PrefetchScalarGridSpec(
            num_scalar_prefetch=0,
            grid=(Bp // batch_tile,),
            in_specs=in_specs,
            out_specs=out_spec,
        ),
        compiler_params=pltpu.CompilerParams(**compiler_kwargs),
        cost_estimate=cost,
    )(xp, *flat_params)

    if return_padded:
        # Lane-dense (Bp, round_up(latent,128)) slab: let the consumer fuse the
        # un-pad slice instead of paying an extra HBM round trip here.
        return out
    return out[:B, :latent_dim]


# ----------------------------------------------------------------------------
# Init + pure-JAX reference.
# ----------------------------------------------------------------------------
def init_params(key, encoder_dims, latent_dim):
    """Deterministic init mimicking nn.Linear defaults (uniform +-1/sqrt(fan_in))."""
    dims = list(encoder_dims) + [latent_dim]
    params = []
    for i in range(len(dims) - 1):
        d_in, d_out = dims[i], dims[i + 1]
        key, kw, kb = jax.random.split(key, 3)
        bound = 1.0 / (d_in ** 0.5)
        w = jax.random.uniform(kw, (d_in, d_out), jnp.float32, -bound, bound)
        b = jax.random.uniform(kb, (1, d_out), jnp.float32, -bound, bound)
        params.append((w, b))
    return params


def reference_forward(x, params, compute_dtype=jnp.float32):
    """Pure-JAX reference. With compute_dtype=bf16 it mirrors the kernel's
    bf16-inputs / f32-accumulate matmuls."""
    h = x.astype(jnp.float32)
    for w, b in params:
        acc = jnp.dot(h.astype(compute_dtype), w.astype(compute_dtype),
                      preferred_element_type=jnp.float32)
        h = jnp.maximum(acc + b, 0.0)
    return h


if __name__ == "__main__":
    key = jax.random.PRNGKey(0)

    # Small, module-consistent shapes.
    encoder_dims = [32, 64, 48]   # encoder: Linear(32,64)+ReLU, Linear(64,48)+ReLU
    latent_dim = 16               # head:    Linear(48,16)+ReLU
    batch = 128

    kx, kp = jax.random.split(key)
    x = jax.random.normal(kx, (batch, encoder_dims[0]), jnp.float32)
    params = init_params(kp, encoder_dims, latent_dim)

    # One-time prep (padding + bf16 cast hoisted out of the forward path).
    prepped = prepare_params(params)

    out = cond_variational_embedding(x, prepped)
    out = jax.block_until_ready(out)
    assert out.shape == (batch, latent_dim)

    # Tight check vs. a reference using the same bf16-input / f32-accumulate math.
    ref_bf16 = reference_forward(x, params, compute_dtype=jnp.bfloat16)
    assert jnp.max(jnp.abs(out - ref_bf16)) < 2e-3, "mismatch vs. bf16-matched reference"

    # Loose semantic check vs. the full-f32 module forward.
    ref_f32 = reference_forward(x, params, compute_dtype=jnp.float32)
    assert jnp.max(jnp.abs(out - ref_f32)) < 1e-1, "mismatch vs. f32 reference"

    print("KERNEL_OK")
</pallas_src>

<mosaic_0001>
module attributes {stable_mosaic.version = 11 : i64} {
  func.func @_mlp_kernel(%arg0: i32, %arg1: memref<128x32xf32, #tpu.memory_space<vmem>>, %arg2: memref<32x128xbf16, #tpu.memory_space<vmem>>, %arg3: memref<1x128xf32, #tpu.memory_space<vmem>>, %arg4: memref<128x128xbf16, #tpu.memory_space<vmem>>, %arg5: memref<1x128xf32, #tpu.memory_space<vmem>>, %arg6: memref<128x128xbf16, #tpu.memory_space<vmem>>, %arg7: memref<1x128xf32, #tpu.memory_space<vmem>>, %arg8: memref<128x128xf32, #tpu.memory_space<vmem>>) attributes {dimension_semantics = [#tpu.dimension_semantics<parallel>], iteration_bounds = array<i64: 1>, scalar_prefetch = 0 : i64, scratch_operands = 0 : i64, tpu.core_type = #tpu.core_type<tc>, window_params = [{transform_indices = @transform_0, window_bounds = array<i64: 128, 32>}, {pipeline_mode = #tpu.pipeline_mode<synchronous>, transform_indices = @transform_1, window_bounds = array<i64: 32, 128>}, {pipeline_mode = #tpu.pipeline_mode<synchronous>, transform_indices = @transform_2, window_bounds = array<i64: 1, 128>}, {pipeline_mode = #tpu.pipeline_mode<synchronous>, transform_indices = @transform_3, window_bounds = array<i64: 128, 128>}, {pipeline_mode = #tpu.pipeline_mode<synchronous>, transform_indices = @transform_4, window_bounds = array<i64: 1, 128>}, {pipeline_mode = #tpu.pipeline_mode<synchronous>, transform_indices = @transform_5, window_bounds = array<i64: 128, 128>}, {pipeline_mode = #tpu.pipeline_mode<synchronous>, transform_indices = @transform_6, window_bounds = array<i64: 1, 128>}, {transform_indices = @transform_7, window_bounds = array<i64: 128, 128>}]} {
    %c0 = arith.constant 0 : index
    %c0_0 = arith.constant 0 : index
    %0 = vector.load %arg1[%c0, %c0_0] : memref<128x32xf32, #tpu.memory_space<vmem>>, vector<128x32xf32>
    %c0_1 = arith.constant 0 : index
    %c0_2 = arith.constant 0 : index
    %1 = vector.load %arg2[%c0_1, %c0_2] : memref<32x128xbf16, #tpu.memory_space<vmem>>, vector<32x128xbf16>
    %c0_3 = arith.constant 0 : index
    %c0_4 = arith.constant 0 : index
    %2 = vector.load %arg3[%c0_3, %c0_4] : memref<1x128xf32, #tpu.memory_space<vmem>>, vector<1x128xf32>
    %3 = arith.truncf %0 : vector<128x32xf32> to vector<128x32xbf16>
    %cst = arith.constant dense<0.000000e+00> : vector<128x128xf32>
    %4 = tpu.matmul %3, %1, %cst {dimension_numbers = #tpu.dot_dimension_numbers<[1], [0], [0], [1], [0, 0, 1, 1], [], []>} : vector<128x32xbf16>, vector<32x128xbf16>, vector<128x128xf32> -> vector<128x128xf32>
    %5 = vector.broadcast %2 : vector<1x128xf32> to vector<128x128xf32>
    %6 = arith.addf %4, %5 : vector<128x128xf32>
    %cst_5 = arith.constant 0.000000e+00 : f32
    %7 = vector.broadcast %cst_5 : f32 to vector<128x128xf32>
    %8 = arith.maximumf %6, %7 : vector<128x128xf32>
    %c0_6 = arith.constant 0 : index
    %c0_7 = arith.constant 0 : index
    %9 = vector.load %arg4[%c0_6, %c0_7] : memref<128x128xbf16, #tpu.memory_space<vmem>>, vector<128x128xbf16>
    %c0_8 = arith.constant 0 : index
    %c0_9 = arith.constant 0 : index
    %10 = vector.load %arg5[%c0_8, %c0_9] : memref<1x128xf32, #tpu.memory_space<vmem>>, vector<1x128xf32>
    %11 = arith.truncf %8 : vector<128x128xf32> to vector<128x128xbf16>
    %cst_10 = arith.constant dense<0.000000e+00> : vector<128x128xf32>
    %12 = tpu.matmul %11, %9, %cst_10 {dimension_numbers = #tpu.dot_dimension_numbers<[1], [0], [0], [1], [0, 0, 1, 1], [], []>} : vector<128x128xbf16>, vector<128x128xbf16>, vector<128x128xf32> -> vector<128x128xf32>
    %13 = vector.broadcast %10 : vector<1x128xf32> to vector<128x128xf32>
    %14 = arith.addf %12, %13 : vector<128x128xf32>
    %cst_11 = arith.constant 0.000000e+00 : f32
    %15 = vector.broadcast %cst_11 : f32 to vector<128x128xf32>
    %16 = arith.maximumf %14, %15 : vector<128x128xf32>
    %c0_12 = arith.constant 0 : index
    %c0_13 = arith.constant 0 : index
    %17 = vector.load %arg6[%c0_12, %c0_13] : memref<128x128xbf16, #tpu.memory_space<vmem>>, vector<128x128xbf16>
    %c0_14 = arith.constant 0 : index
    %c0_15 = arith.constant 0 : index
    %18 = vector.load %arg7[%c0_14, %c0_15] : memref<1x128xf32, #tpu.memory_space<vmem>>, vector<1x128xf32>
    %19 = arith.truncf %16 : vector<128x128xf32> to vector<128x128xbf16>
    %cst_16 = arith.constant dense<0.000000e+00> : vector<128x128xf32>
    %20 = tpu.matmul %19, %17, %cst_16 {dimension_numbers = #tpu.dot_dimension_numbers<[1], [0], [0], [1], [0, 0, 1, 1], [], []>} : vector<128x128xbf16>, vector<128x128xbf16>, vector<128x128xf32> -> vector<128x128xf32>
    %21 = vector.broadcast %18 : vector<1x128xf32> to vector<128x128xf32>
    %22 = arith.addf %20, %21 : vector<128x128xf32>
    %cst_17 = arith.constant 0.000000e+00 : f32
    %23 = vector.broadcast %cst_17 : f32 to vector<128x128xf32>
    %24 = arith.maximumf %22, %23 : vector<128x128xf32>
    %c0_18 = arith.constant 0 : index
    %c0_19 = arith.constant 0 : index
    %25 = vector.load %arg8[%c0_18, %c0_19] : memref<128x128xf32, #tpu.memory_space<vmem>>, vector<128x128xf32>
    tpu.vector_store %arg8[%c0_18, %c0_19], %24 {strides = array<i32>} : memref<128x128xf32, #tpu.memory_space<vmem>>, vector<128x128xf32>,
    return
  }
  func.func @transform_0(%arg0: i32) -> (i32, i32) {
    %c0_i32 = arith.constant 0 : i32
    %c0_i32_0 = arith.constant 0 : i32
    return %arg0, %c0_i32 : i32, i32
  }
  func.func @transform_1(%arg0: i32) -> (i32, i32) {
    %c0_i32 = arith.constant 0 : i32
    %c0_i32_0 = arith.constant 0 : i32
    %c0_i32_1 = arith.constant 0 : i32
    return %c0_i32, %c0_i32_0 : i32, i32
  }
  func.func @transform_2(%arg0: i32) -> (i32, i32) {
    %c0_i32 = arith.constant 0 : i32
    %c0_i32_0 = arith.constant 0 : i32
    %c0_i32_1 = arith.constant 0 : i32
    return %c0_i32, %c0_i32_0 : i32, i32
  }
  func.func @transform_3(%arg0: i32) -> (i32, i32) {
    %c0_i32 = arith.constant 0 : i32
    %c0_i32_0 = arith.constant 0 : i32
    %c0_i32_1 = arith.constant 0 : i32
    return %c0_i32, %c0_i32_0 : i32, i32
  }
  func.func @transform_4(%arg0: i32) -> (i32, i32) {
    %c0_i32 = arith.constant 0 : i32
    %c0_i32_0 = arith.constant 0 : i32
    %c0_i32_1 = arith.constant 0 : i32
    return %c0_i32, %c0_i32_0 : i32, i32
  }
  func.func @transform_5(%arg0: i32) -> (i32, i32) {
    %c0_i32 = arith.constant 0 : i32
    %c0_i32_0 = arith.constant 0 : i32
    %c0_i32_1 = arith.constant 0 : i32
    return %c0_i32, %c0_i32_0 : i32, i32
  }
  func.func @transform_6(%arg0: i32) -> (i32, i32) {
    %c0_i32 = arith.constant 0 : i32
    %c0_i32_0 = arith.constant 0 : i32
    %c0_i32_1 = arith.constant 0 : i32
    return %c0_i32, %c0_i32_0 : i32, i32
  }
  func.func @transform_7(%arg0: i32) -> (i32, i32) {
    %c0_i32 = arith.constant 0 : i32
    %c0_i32_0 = arith.constant 0 : i32
    return %arg0, %c0_i32 : i32, i32
  }
}

</mosaic_0001>

<llo_original>
// kernel: tpu_custom_call.1
$region0: #{tpu_custom_call.1}
  #allocation0 [shape = 'u32[]', space=smem, size = 0x4, offset = 0x4, fixed_abs, tag = 'smem constant byte address 0x4 - core index']
  #allocation1 [shape = 'u32[144,128]{1,0:T(1,128)}', space=vmem, size = 0x12000, scoped, tag = 'internal scratch']
  %s0 = inlined_call_operand.vmem [shape: f32[128,32], index: 0, kind: input, shape index: {}]
  %s1 = inlined_call_operand.vmem [shape: bf16[32,128], index: 1, kind: input, shape index: {}]
  %s2 = inlined_call_operand.vmem [shape: f32[1,128], index: 2, kind: input, shape index: {}]
  %s3 = inlined_call_operand.vmem [shape: bf16[128,128], index: 3, kind: input, shape index: {}]
  %s4 = inlined_call_operand.vmem [shape: f32[1,128], index: 4, kind: input, shape index: {}]
  %s5 = inlined_call_operand.vmem [shape: bf16[128,128], index: 5, kind: input, shape index: {}]
  %s6 = inlined_call_operand.vmem [shape: f32[1,128], index: 6, kind: input, shape index: {}]
  %s7 = inlined_call_operand.hbm [shape: f32[128,128], index: 7, kind: output, shape index: {}]
  %s8 = sld [smem:[#allocation0]]
  $region38: #{tpu_custom_call.1} parent=0
    _
  %s10 = ssub.s32 1, %s8
  %s11 = scalar_select 0, %s10, %s8
  $region1: #{tpu_custom_call.1} parent=0
    #allocation2 [shape = 'u8[65536]{0}', space=vmem, size = 0x10000, scoped, tag = 'output window, operand 0, single buffered']
    #allocation3 [shape = 's32[1]{0}', space=sflag, size = 0x4, scoped, tag = 'scoped memory for tpu_custom_call.1']
    %12 = vsyncpa [#allocation3], 0
    // Predicated region
    $region2: #{tpu_custom_call.1} parent=1 // pred_check
      _
    $region3: #{tpu_custom_call.1} parent=1 // pred_check_branch
      %14 = sbr.rel (0) target = $region5
    $region4: #{tpu_custom_call.1} parent=1 // pred_region
      _
    $region5: #{tpu_custom_call.1} parent=1 // pred_fallthru
      _
    // Predicated region
    $region6: #{tpu_custom_call.1} parent=1 // pred_check
      _
    $region7: #{tpu_custom_call.1} parent=1 // pred_check_branch
      %16 = sbr.rel (0) target = $region9
    $region8: #{tpu_custom_call.1} parent=1 // pred_region
      _
    $region9: #{tpu_custom_call.1} parent=1 // pred_fallthru
      _
    // Predicated region
    $region10: #{tpu_custom_call.1} parent=1 // pred_check
      _
    $region11: #{tpu_custom_call.1} parent=1 // pred_check_branch
      %18 = sbr.rel (0) target = $region13
    $region12: #{tpu_custom_call.1} parent=1 // pred_region
      _
    $region13: #{tpu_custom_call.1} parent=1 // pred_fallthru
      _
    // Predicated region
    $region14: #{tpu_custom_call.1} parent=1 // pred_check
      _
    $region15: #{tpu_custom_call.1} parent=1 // pred_check_branch
      %20 = sbr.rel (0) target = $region17
    $region16: #{tpu_custom_call.1} parent=1 // pred_region
      _
    $region17: #{tpu_custom_call.1} parent=1 // pred_fallthru
      _
    // Predicated region
    $region18: #{tpu_custom_call.1} parent=1 // pred_check
      _
    $region19: #{tpu_custom_call.1} parent=1 // pred_check_branch
      %22 = sbr.rel (0) target = $region21
    $region20: #{tpu_custom_call.1} parent=1 // pred_region
      _
    $region21: #{tpu_custom_call.1} parent=1 // pred_fallthru
      _
    // Predicated region
    $region22: #{tpu_custom_call.1} parent=1 // pred_check
      _
    $region23: #{tpu_custom_call.1} parent=1 // pred_check_branch
      %24 = sbr.rel (0) target = $region25
    $region24: #{tpu_custom_call.1} parent=1 // pred_region
      _
    $region25: #{tpu_custom_call.1} parent=1 // pred_fallthru
      _
    // Predicated region
    $region26: #{tpu_custom_call.1} parent=1 // pred_check
      _
    $region27: #{tpu_custom_call.1} parent=1 // pred_check_branch
      %26 = sbr.rel (0) target = $region29
    $region28: #{tpu_custom_call.1} parent=1 // pred_region
      _
    $region29: #{tpu_custom_call.1} parent=1 // pred_fallthru
      _
    %v28 = vld [vmem:[%s0] sm:$0xff]
    %v29 = vld [vmem:[%s0 + $0x8] sm:$0xff]
    %v30 = vld [vmem:[%s0 + $0x10] sm:$0xff]
    %v31 = vld [vmem:[%s0 + $0x18] sm:$0xff]
    %v32 = vld [vmem:[%s0 + $0x20] sm:$0xff]
    %v33 = vld [vmem:[%s0 + $0x28] sm:$0xff]
    %v34 = vld [vmem:[%s0 + $0x30] sm:$0xff]
    %v35 = vld [vmem:[%s0 + $0x38] sm:$0xff]
    %v36 = vld [vmem:[%s0 + $0x40] sm:$0xff]
    %v37 = vld [vmem:[%s0 + $0x48] sm:$0xff]
    %v38 = vld [vmem:[%s0 + $0x50] sm:$0xff]
    %v39 = vld [vmem:[%s0 + $0x58] sm:$0xff]
    %v40 = vld [vmem:[%s0 + $0x60] sm:$0xff]
    %v41 = vld [vmem:[%s0 + $0x68] sm:$0xff]
    %v42 = vld [vmem:[%s0 + $0x70] sm:$0xff]
    %v43 = vld [vmem:[%s0 + $0x78] sm:$0xff]
    %v44 = vld [vmem:[%s1] sm:$0xf]
    %v45 = vld [vmem:[%s1 + $0x4] sm:$0xf]
    %v46 = vld [vmem:[%s1 + $0x8] sm:$0xf]
    %v47 = vld [vmem:[%s1 + $0xc] sm:$0xf]
    %v48 = vld [vmem:[%s2] sm:$0x1]
    %v49 = vpack.c.bf16 %v29, %v28
    %v50 = vpack.c.bf16 %v31, %v30
    %v51 = vpack.c.bf16 %v33, %v32
    %v52 = vpack.c.bf16 %v35, %v34
    %v53 = vpack.c.bf16 %v37, %v36
    %v54 = vpack.c.bf16 %v39, %v38
    %v55 = vpack.c.bf16 %v41, %v40
    %v56 = vpack.c.bf16 %v43, %v42
    %v58 = vlaneseq
    %v59 = vshrl.u32 %v58, 7
    %v60 = vsub.s32 0, %v59
    %v61 = vrot.slane %v48, %v60
    %v67 = vunpack.c.l.b16 %v44
    %v68 = vunpack.c.l.b16 %v45
    %v69 = vunpack.c.l.b16 %v46
    %v70 = vunpack.c.l.b16 %v47
    %v71 = vpack.c.b16 %v68, %v67
    %v72 = vpack.c.b16 %v70, %v69
    %vm75 = vcmask 261120
    %v77 = vsel %vm75, %v49, 0
    %v80 = vsel %vm75, %v50, 0
    %v83 = vsel %vm75, %v51, 0
    %v86 = vsel %vm75, %v52, 0
    %v89 = vsel %vm75, %v53, 0
    %v92 = vsel %vm75, %v54, 0
    %v95 = vsel %vm75, %v55, 0
    %v98 = vsel %vm75, %v56, 0
    %100 = vmatprep.subr.bf16.mxu0 0
    %101 = vmatpush1.bf16.msra.mxu0 %v71
    %102 = vmatprep.subr.bf16.mxu0 0
    %103 = vmatpush1.bf16.msra.mxu0 %v72
    %104 = vmatprep.subr.bf16.mxu0 0
    %105 = vmatpush1.bf16.msra.mxu0 0
    %106 = vmatprep.subr.bf16.mxu0 0
    %107 = vmatpush1.bf16.msra.mxu0 0
    %108 = vmatprep.subr.bf16.mxu0 0
    %109 = vmatpush1.bf16.msra.mxu0 0
    %110 = vmatprep.subr.bf16.mxu0 0
    %111 = vmatpush1.bf16.msra.mxu0 0
    %112 = vmatprep.subr.bf16.mxu0 0
    %113 = vmatpush1.bf16.msra.mxu0 0
    %114 = vmatprep.subr.bf16.mxu0 0
    %115 = vmatpush1.bf16.msra.mxu0 0
    %116 = vmatprep.subr.bf16.mxu0 0
    %117 = vmatpush1.bf16.msra.mxu0 0
    %118 = vmatprep.subr.bf16.mxu0 0
    %119 = vmatpush1.bf16.msra.mxu0 0
    %120 = vmatprep.subr.bf16.mxu0 0
    %121 = vmatpush1.bf16.msra.mxu0 0
    %122 = vmatprep.subr.bf16.mxu0 0
    %123 = vmatpush1.bf16.msra.mxu0 0
    %124 = vmatprep.subr.bf16.mxu0 0
    %125 = vmatpush1.bf16.msra.mxu0 0
    %126 = vmatprep.subr.bf16.mxu0 0
    %127 = vmatpush1.bf16.msra.mxu0 0
    %128 = vmatprep.subr.bf16.mxu0 0
    %129 = vmatpush1.bf16.msra.mxu0 0
    %130 = vmatprep.subr.bf16.mxu0 0
    %131 = vmatpush1.bf16.msra.mxu0 0
    %132 = vmatprep.mubr.bf16.mxu0 0
    %133 = vmatmul.mubr.bf16.gmra.mrb[0].mxu0 %v77
    %v134 = vpop.f32.mrb[0].mxu0
    %v135 = vadd.f32 %v61, %v134
    %v136 = vpop.f32.mrb[0].mxu0
    %v137 = vpop.f32.mrb[0].mxu0
    %v138 = vadd.f32 %v61, %v137
    %v139 = vpop.f32.mrb[0].mxu0
    %140 = vmatprep.mubr.bf16.mxu0 0
    %141 = vmatmul.mubr.bf16.gmra.mrb[0].mxu0 %v80
    %v142 = vpop.f32.mrb[0].mxu0
    %v143 = vadd.f32 %v61, %v142
    %v144 = vpop.f32.mrb[0].mxu0
    %v145 = vpop.f32.mrb[0].mxu0
    %v146 = vadd.f32 %v61, %v145
    %v147 = vpop.f32.mrb[0].mxu0
    %148 = vmatprep.mubr.bf16.mxu0 0
    %149 = vmatmul.mubr.bf16.gmra.mrb[0].mxu0 %v83
    %v150 = vpop.f32.mrb[0].mxu0
    %v151 = vadd.f32 %v61, %v150
    %v152 = vpop.f32.mrb[0].mxu0
    %v153 = vpop.f32.mrb[0].mxu0
    %v154 = vadd.f32 %v61, %v153
    %v155 = vpop.f32.mrb[0].mxu0
    %156 = vmatprep.mubr.bf16.mxu0 0
    %157 = vmatmul.mubr.bf16.gmra.mrb[0].mxu0 %v86
    %v158 = vpop.f32.mrb[0].mxu0
    %v159 = vadd.f32 %v61, %v158
    %v160 = vpop.f32.mrb[0].mxu0
    %v161 = vpop.f32.mrb[0].mxu0
    %v162 = vadd.f32 %v61, %v161
    %v163 = vpop.f32.mrb[0].mxu0
    %164 = vmatprep.mubr.bf16.mxu0 0
    %165 = vmatmul.mubr.bf16.gmra.mrb[0].mxu0 %v89
    %v166 = vpop.f32.mrb[0].mxu0
    %v167 = vadd.f32 %v61, %v166
    %v168 = vpop.f32.mrb[0].mxu0
    %v169 = vpop.f32.mrb[0].mxu0
    %v170 = vadd.f32 %v61, %v169
    %v171 = vpop.f32.mrb[0].mxu0
    %172 = vmatprep.mubr.bf16.mxu0 0
    %173 = vmatmul.mubr.bf16.gmra.mrb[0].mxu0 %v92
    %v174 = vpop.f32.mrb[0].mxu0
    %v175 = vadd.f32 %v61, %v174
    %v176 = vpop.f32.mrb[0].mxu0
    %v177 = vpop.f32.mrb[0].mxu0
    %v178 = vadd.f32 %v61, %v177
    %v179 = vpop.f32.mrb[0].mxu0
    %180 = vmatprep.mubr.bf16.mxu0 0
    %181 = vmatmul.mubr.bf16.gmra.mrb[0].mxu0 %v95
    %v182 = vpop.f32.mrb[0].mxu0
    %v183 = vadd.f32 %v61, %v182
    %v184 = vpop.f32.mrb[0].mxu0
    %v185 = vpop.f32.mrb[0].mxu0
    %v186 = vadd.f32 %v61, %v185
    %v187 = vpop.f32.mrb[0].mxu0
    %188 = vmatprep.mubr.bf16.mxu0 0
    %189 = vmatmul.mubr.bf16.gmra.mrb[0].mxu0 %v98
    %v190 = vpop.f32.mrb[0].mxu0
    %v191 = vadd.f32 %v61, %v190
    %v192 = vpop.f32.mrb[0].mxu0
    %v193 = vpop.f32.mrb[0].mxu0
    %v194 = vadd.f32 %v61, %v193
    %v195 = vpop.f32.mrb[0].mxu0
    %196 = vdwg.mxu0
    %v197 = vmax.f32 %v135, 0.0
    %v198 = vmax.f32 %v138, 0.0
    %v199 = vmax.f32 %v143, 0.0
    %v200 = vmax.f32 %v146, 0.0
    %v201 = vmax.f32 %v151, 0.0
    %v202 = vmax.f32 %v154, 0.0
    %v203 = vmax.f32 %v159, 0.0
    %v204 = vmax.f32 %v162, 0.0
    %v205 = vmax.f32 %v167, 0.0
    %v206 = vmax.f32 %v170, 0.0
    %v207 = vmax.f32 %v175, 0.0
    %v208 = vmax.f32 %v178, 0.0
    %v209 = vmax.f32 %v183, 0.0
    %v210 = vmax.f32 %v186, 0.0
    %v211 = vmax.f32 %v191, 0.0
    %v212 = vmax.f32 %v194, 0.0
    %v213 = vld [vmem:[%s3] sm:$0xf]
    %v214 = vld [vmem:[%s3 + $0x4] sm:$0xf]
    %v215 = vld [vmem:[%s3 + $0x8] sm:$0xf]
    %v216 = vld [vmem:[%s3 + $0xc] sm:$0xf]
    %v217 = vld [vmem:[%s3 + $0x10] sm:$0xf]
    %v218 = vld [vmem:[%s3 + $0x14] sm:$0xf]
    %v219 = vld [vmem:[%s3 + $0x18] sm:$0xf]
    %v220 = vld [vmem:[%s3 + $0x1c] sm:$0xf]
    %v221 = vld [vmem:[%s3 + $0x20] sm:$0xf]
    %v222 = vld [vmem:[%s3 + $0x24] sm:$0xf]
    %v223 = vld [vmem:[%s3 + $0x28] sm:$0xf]
    %v224 = vld [vmem:[%s3 + $0x2c] sm:$0xf]
    %v225 = vld [vmem:[%s3 + $0x30] sm:$0xf]
    %v226 = vld [vmem:[%s3 + $0x34] sm:$0xf]
    %v227 = vld [vmem:[%s3 + $0x38] sm:$0xf]
    %v228 = vld [vmem:[%s3 + $0x3c] sm:$0xf]
    %v229 = vld [vmem:[%s4] sm:$0x1]
    %v230 = vpack.c.bf16 %v198, %v197
    %v231 = vpack.c.bf16 %v200, %v199
    %v232 = vpack.c.bf16 %v202, %v201
    %v233 = vpack.c.bf16 %v204, %v203
    %v234 = vpack.c.bf16 %v206, %v205
    %v235 = vpack.c.bf16 %v208, %v207
    %v236 = vpack.c.bf16 %v210, %v209
    %v237 = vpack.c.bf16 %v212, %v211
    %v239 = vlaneseq
    %v240 = vshrl.u32 %v239, 7
    %v241 = vsub.s32 0, %v240
    %v242 = vrot.slane %v229, %v241
    %v260 = vunpack.c.l.b16 %v213
    %v261 = vunpack.c.l.b16 %v214
    %v262 = vunpack.c.l.b16 %v215
    %v263 = vunpack.c.l.b16 %v216
    %v264 = vunpack.c.l.b16 %v217
    %v265 = vunpack.c.l.b16 %v218
    %v266 = vunpack.c.l.b16 %v219
    %v267 = vunpack.c.l.b16 %v220
    %v268 = vunpack.c.l.b16 %v221
    %v269 = vunpack.c.l.b16 %v222
    %v270 = vunpack.c.l.b16 %v223
    %v271 = vunpack.c.l.b16 %v224
    %v272 = vunpack.c.l.b16 %v225
    %v273 = vunpack.c.l.b16 %v226
    %v274 = vunpack.c.l.b16 %v227
    %v275 = vunpack.c.l.b16 %v228
    %v276 = vpack.c.b16 %v261, %v260
    %v277 = vpack.c.b16 %v263, %v262
    %v278 = vpack.c.b16 %v265, %v264
    %v279 = vpack.c.b16 %v267, %v266
    %v280 = vpack.c.b16 %v269, %v268
    %v281 = vpack.c.b16 %v271, %v270
    %v282 = vpack.c.b16 %v273, %v272
    %v283 = vpack.c.b16 %v275, %v274
    %292 = vmatprep.subr.bf16.mxu0 0
    %293 = vmatpush1.bf16.msra.mxu0 %v276
    %294 = vmatprep.subr.bf16.mxu0 0
    %295 = vmatpush1.bf16.msra.mxu0 %v277
    %296 = vmatprep.subr.bf16.mxu0 0
    %297 = vmatpush1.bf16.msra.mxu0 %v278
    %298 = vmatprep.subr.bf16.mxu0 0
    %299 = vmatpush1.bf16.msra.mxu0 %v279
    %300 = vmatprep.subr.bf16.mxu0 0
    %301 = vmatpush1.bf16.msra.mxu0 %v280
    %302 = vmatprep.subr.bf16.mxu0 0
    %303 = vmatpush1.bf16.msra.mxu0 %v281
    %304 = vmatprep.subr.bf16.mxu0 0
    %305 = vmatpush1.bf16.msra.mxu0 %v282
    %306 = vmatprep.subr.bf16.mxu0 0
    %307 = vmatpush1.bf16.msra.mxu0 %v283
    %308 = vmatprep.subr.bf16.mxu0 0
    %309 = vmatpush1.bf16.msra.mxu0 0
    %310 = vmatprep.subr.bf16.mxu0 0
    %311 = vmatpush1.bf16.msra.mxu0 0
    %312 = vmatprep.subr.bf16.mxu0 0
    %313 = vmatpush1.bf16.msra.mxu0 0
    %314 = vmatprep.subr.bf16.mxu0 0
    %315 = vmatpush1.bf16.msra.mxu0 0
    %316 = vmatprep.subr.bf16.mxu0 0
    %317 = vmatpush1.bf16.msra.mxu0 0
    %318 = vmatprep.subr.bf16.mxu0 0
    %319 = vmatpush1.bf16.msra.mxu0 0
    %320 = vmatprep.subr.bf16.mxu0 0
    %321 = vmatpush1.bf16.msra.mxu0 0
    %322 = vmatprep.subr.bf16.mxu0 0
    %323 = vmatpush1.bf16.msra.mxu0 0
    %324 = vmatprep.mubr.bf16.mxu0 0
    %325 = vmatmul.mubr.bf16.gmra.mrb[0].mxu0 %v230
    %v326 = vpop.f32.mrb[0].mxu0
    %v327 = vadd.f32 %v242, %v326
    %v328 = vpop.f32.mrb[0].mxu0
    %v329 = vpop.f32.mrb[0].mxu0
    %v330 = vadd.f32 %v242, %v329
    %v331 = vpop.f32.mrb[0].mxu0
    %332 = vmatprep.mubr.bf16.mxu0 0
    %333 = vmatmul.mubr.bf16.gmra.mrb[0].mxu0 %v231
    %v334 = vpop.f32.mrb[0].mxu0
    %v335 = vadd.f32 %v242, %v334
    %v336 = vpop.f32.mrb[0].mxu0
    %v337 = vpop.f32.mrb[0].mxu0
    %v338 = vadd.f32 %v242, %v337
    %v339 = vpop.f32.mrb[0].mxu0
    %340 = vmatprep.mubr.bf16.mxu0 0
    %341 = vmatmul.mubr.bf16.gmra.mrb[0].mxu0 %v232
    %v342 = vpop.f32.mrb[0].mxu0
    %v343 = vadd.f32 %v242, %v342
    %v344 = vpop.f32.mrb[0].mxu0
    %v345 = vpop.f32.mrb[0].mxu0
    %v346 = vadd.f32 %v242, %v345
    %v347 = vpop.f32.mrb[0].mxu0
    %348 = vmatprep.mubr.bf16.mxu0 0
    %349 = vmatmul.mubr.bf16.gmra.mrb[0].mxu0 %v233
    %v350 = vpop.f32.mrb[0].mxu0
    %v351 = vadd.f32 %v242, %v350
    %v352 = vpop.f32.mrb[0].mxu0
    %v353 = vpop.f32.mrb[0].mxu0
    %v354 = vadd.f32 %v242, %v353
    %v355 = vpop.f32.mrb[0].mxu0
    %356 = vmatprep.mubr.bf16.mxu0 0
    %357 = vmatmul.mubr.bf16.gmra.mrb[0].mxu0 %v234
    %v358 = vpop.f32.mrb[0].mxu0
    %v359 = vadd.f32 %v242, %v358
    %v360 = vpop.f32.mrb[0].mxu0
    %v361 = vpop.f32.mrb[0].mxu0
    %v362 = vadd.f32 %v242, %v361
    %v363 = vpop.f32.mrb[0].mxu0
    %364 = vmatprep.mubr.bf16.mxu0 0
    %365 = vmatmul.mubr.bf16.gmra.mrb[0].mxu0 %v235
    %v366 = vpop.f32.mrb[0].mxu0
    %v367 = vadd.f32 %v242, %v366
    %v368 = vpop.f32.mrb[0].mxu0
    %v369 = vpop.f32.mrb[0].mxu0
    %v370 = vadd.f32 %v242, %v369
    %v371 = vpop.f32.mrb[0].mxu0
    %372 = vmatprep.mubr.bf16.mxu0 0
    %373 = vmatmul.mubr.bf16.gmra.mrb[0].mxu0 %v236
    %v374 = vpop.f32.mrb[0].mxu0
    %v375 = vadd.f32 %v242, %v374
    %v376 = vpop.f32.mrb[0].mxu0
    %v377 = vpop.f32.mrb[0].mxu0
    %v378 = vadd.f32 %v242, %v377
    %v379 = vpop.f32.mrb[0].mxu0
    %380 = vmatprep.mubr.bf16.mxu0 0
    %381 = vmatmul.mubr.bf16.gmra.mrb[0].mxu0 %v237
    %v382 = vpop.f32.mrb[0].mxu0
    %v383 = vadd.f32 %v242, %v382
    %v384 = vpop.f32.mrb[0].mxu0
    %v385 = vpop.f32.mrb[0].mxu0
    %v386 = vadd.f32 %v242, %v385
    %v387 = vpop.f32.mrb[0].mxu0
    %388 = vdwg.mxu0
    %v389 = vmax.f32 %v327, 0.0
    %v390 = vmax.f32 %v330, 0.0
    %v391 = vmax.f32 %v335, 0.0
    %v392 = vmax.f32 %v338, 0.0
    %v393 = vmax.f32 %v343, 0.0
    %v394 = vmax.f32 %v346, 0.0
    %v395 = vmax.f32 %v351, 0.0
    %v396 = vmax.f32 %v354, 0.0
    %v397 = vmax.f32 %v359, 0.0
    %v398 = vmax.f32 %v362, 0.0
    %v399 = vmax.f32 %v367, 0.0
    %v400 = vmax.f32 %v370, 0.0
    %v401 = vmax.f32 %v375, 0.0
    %v402 = vmax.f32 %v378, 0.0
    %v403 = vmax.f32 %v383, 0.0
    %v404 = vmax.f32 %v386, 0.0
    %v405 = vld [vmem:[%s5] sm:$0xf]
    %v406 = vld [vmem:[%s5 + $0x4] sm:$0xf]
    %v407 = vld [vmem:[%s5 + $0x8] sm:$0xf]
    %v408 = vld [vmem:[%s5 + $0xc] sm:$0xf]
    %v409 = vld [vmem:[%s5 + $0x10] sm:$0xf]
    %v410 = vld [vmem:[%s5 + $0x14] sm:$0xf]
    %v411 = vld [vmem:[%s5 + $0x18] sm:$0xf]
    %v412 = vld [vmem:[%s5 + $0x1c] sm:$0xf]
    %v413 = vld [vmem:[%s5 + $0x20] sm:$0xf]
    %v414 = vld [vmem:[%s5 + $0x24] sm:$0xf]
    %v415 = vld [vmem:[%s5 + $0x28] sm:$0xf]
    %v416 = vld [vmem:[%s5 + $0x2c] sm:$0xf]
    %v417 = vld [vmem:[%s5 + $0x30] sm:$0xf]
    %v418 = vld [vmem:[%s5 + $0x34] sm:$0xf]
    %v419 = vld [vmem:[%s5 + $0x38] sm:$0xf]
    %v420 = vld [vmem:[%s5 + $0x3c] sm:$0xf]
    %v421 = vld [vmem:[%s6] sm:$0x1]
    %v422 = vpack.c.bf16 %v390, %v389
    %v423 = vpack.c.bf16 %v392, %v391
    %v424 = vpack.c.bf16 %v394, %v393
    %v425 = vpack.c.bf16 %v396, %v395
    %v426 = vpack.c.bf16 %v398, %v397
    %v427 = vpack.c.bf16 %v400, %v399
    %v428 = vpack.c.bf16 %v402, %v401
    %v429 = vpack.c.bf16 %v404, %v403
    %v431 = vlaneseq
    %v432 = vshrl.u32 %v431, 7
    %v433 = vsub.s32 0, %v432
    %v434 = vrot.slane %v421, %v433
    %v452 = vunpack.c.l.b16 %v405
    %v453 = vunpack.c.l.b16 %v406
    %v454 = vunpack.c.l.b16 %v407
    %v455 = vunpack.c.l.b16 %v408
    %v456 = vunpack.c.l.b16 %v409
    %v457 = vunpack.c.l.b16 %v410
    %v458 = vunpack.c.l.b16 %v411
    %v459 = vunpack.c.l.b16 %v412
    %v460 = vunpack.c.l.b16 %v413
    %v461 = vunpack.c.l.b16 %v414
    %v462 = vunpack.c.l.b16 %v415
    %v463 = vunpack.c.l.b16 %v416
    %v464 = vunpack.c.l.b16 %v417
    %v465 = vunpack.c.l.b16 %v418
    %v466 = vunpack.c.l.b16 %v419
    %v467 = vunpack.c.l.b16 %v420
    %v468 = vpack.c.b16 %v453, %v452
    %v469 = vpack.c.b16 %v455, %v454
    %v470 = vpack.c.b16 %v457, %v456
    %v471 = vpack.c.b16 %v459, %v458
    %v472 = vpack.c.b16 %v461, %v460
    %v473 = vpack.c.b16 %v463, %v462
    %v474 = vpack.c.b16 %v465, %v464
    %v475 = vpack.c.b16 %v467, %v466
    %484 = vmatprep.subr.bf16.mxu0 0
    %485 = vmatpush1.bf16.msra.mxu0 %v468
    %486 = vmatprep.subr.bf16.mxu0 0
    %487 = vmatpush1.bf16.msra.mxu0 %v469
    %488 = vmatprep.subr.bf16.mxu0 0
    %489 = vmatpush1.bf16.msra.mxu0 %v470
    %490 = vmatprep.subr.bf16.mxu0 0
    %491 = vmatpush1.bf16.msra.mxu0 %v471
    %492 = vmatprep.subr.bf16.mxu0 0
    %493 = vmatpush1.bf16.msra.mxu0 %v472
    %494 = vmatprep.subr.bf16.mxu0 0
    %495 = vmatpush1.bf16.msra.mxu0 %v473
    %496 = vmatprep.subr.bf16.mxu0 0
    %497 = vmatpush1.bf16.msra.mxu0 %v474
    %498 = vmatprep.subr.bf16.mxu0 0
    %499 = vmatpush1.bf16.msra.mxu0 %v475
    %500 = vmatprep.subr.bf16.mxu0 0
    %501 = vmatpush1.bf16.msra.mxu0 0
    %502 = vmatprep.subr.bf16.mxu0 0
    %503 = vmatpush1.bf16.msra.mxu0 0
    %504 = vmatprep.subr.bf16.mxu0 0
    %505 = vmatpush1.bf16.msra.mxu0 0
    %506 = vmatprep.subr.bf16.mxu0 0
    %507 = vmatpush1.bf16.msra.mxu0 0
    %508 = vmatprep.subr.bf16.mxu0 0
    %509 = vmatpush1.bf16.msra.mxu0 0
    %510 = vmatprep.subr.bf16.mxu0 0
    %511 = vmatpush1.bf16.msra.mxu0 0
    %512 = vmatprep.subr.bf16.mxu0 0
    %513 = vmatpush1.bf16.msra.mxu0 0
    %514 = vmatprep.subr.bf16.mxu0 0
    %515 = vmatpush1.bf16.msra.mxu0 0
    %516 = vmatprep.mubr.bf16.mxu0 0
    %517 = vmatmul.mubr.bf16.gmra.mrb[0].mxu0 %v422
    %v518 = vpop.f32.mrb[0].mxu0
    %v519 = vadd.f32 %v434, %v518
    %v520 = vpop.f32.mrb[0].mxu0
    %v521 = vpop.f32.mrb[0].mxu0
    %v522 = vadd.f32 %v434, %v521
    %v523 = vpop.f32.mrb[0].mxu0
    %524 = vmatprep.mubr.bf16.mxu0 0
    %525 = vmatmul.mubr.bf16.gmra.mrb[0].mxu0 %v423
    %v526 = vpop.f32.mrb[0].mxu0
    %v527 = vadd.f32 %v434, %v526
    %v528 = vpop.f32.mrb[0].mxu0
    %v529 = vpop.f32.mrb[0].mxu0
    %v530 = vadd.f32 %v434, %v529
    %v531 = vpop.f32.mrb[0].mxu0
    %532 = vmatprep.mubr.bf16.mxu0 0
    %533 = vmatmul.mubr.bf16.gmra.mrb[0].mxu0 %v424
    %v534 = vpop.f32.mrb[0].mxu0
    %v535 = vadd.f32 %v434, %v534
    %v536 = vpop.f32.mrb[0].mxu0
    %v537 = vpop.f32.mrb[0].mxu0
    %v538 = vadd.f32 %v434, %v537
    %v539 = vpop.f32.mrb[0].mxu0
    %540 = vmatprep.mubr.bf16.mxu0 0
    %541 = vmatmul.mubr.bf16.gmra.mrb[0].mxu0 %v425
    %v542 = vpop.f32.mrb[0].mxu0
    %v543 = vadd.f32 %v434, %v542
    %v544 = vpop.f32.mrb[0].mxu0
    %v545 = vpop.f32.mrb[0].mxu0
    %v546 = vadd.f32 %v434, %v545
    %v547 = vpop.f32.mrb[0].mxu0
    %548 = vmatprep.mubr.bf16.mxu0 0
    %549 = vmatmul.mubr.bf16.gmra.mrb[0].mxu0 %v426
    %v550 = vpop.f32.mrb[0].mxu0
    %v551 = vadd.f32 %v434, %v550
    %v552 = vpop.f32.mrb[0].mxu0
    %v553 = vpop.f32.mrb[0].mxu0
    %v554 = vadd.f32 %v434, %v553
    %v555 = vpop.f32.mrb[0].mxu0
    %556 = vmatprep.mubr.bf16.mxu0 0
    %557 = vmatmul.mubr.bf16.gmra.mrb[0].mxu0 %v427
    %v558 = vpop.f32.mrb[0].mxu0
    %v559 = vadd.f32 %v434, %v558
    %v560 = vpop.f32.mrb[0].mxu0
    %v561 = vpop.f32.mrb[0].mxu0
    %v562 = vadd.f32 %v434, %v561
    %v563 = vpop.f32.mrb[0].mxu0
    %564 = vmatprep.mubr.bf16.mxu0 0
    %565 = vmatmul.mubr.bf16.gmra.mrb[0].mxu0 %v428
    %v566 = vpop.f32.mrb[0].mxu0
    %v567 = vadd.f32 %v434, %v566
    %v568 = vpop.f32.mrb[0].mxu0
    %v569 = vpop.f32.mrb[0].mxu0
    %v570 = vadd.f32 %v434, %v569
    %v571 = vpop.f32.mrb[0].mxu0
    %572 = vmatprep.mubr.bf16.mxu0 0
    %573 = vmatmul.mubr.bf16.gmra.mrb[0].mxu0 %v429
    %v574 = vpop.f32.mrb[0].mxu0
    %v575 = vadd.f32 %v434, %v574
    %v576 = vpop.f32.mrb[0].mxu0
    %v577 = vpop.f32.mrb[0].mxu0
    %v578 = vadd.f32 %v434, %v577
    %v579 = vpop.f32.mrb[0].mxu0
    %580 = vdwg.mxu0
    %v581 = vmax.f32 %v519, 0.0
    %v582 = vmax.f32 %v522, 0.0
    %v583 = vmax.f32 %v527, 0.0
    %v584 = vmax.f32 %v530, 0.0
    %v585 = vmax.f32 %v535, 0.0
    %v586 = vmax.f32 %v538, 0.0
    %v587 = vmax.f32 %v543, 0.0
    %v588 = vmax.f32 %v546, 0.0
    %v589 = vmax.f32 %v551, 0.0
    %v590 = vmax.f32 %v554, 0.0
    %v591 = vmax.f32 %v559, 0.0
    %v592 = vmax.f32 %v562, 0.0
    %v593 = vmax.f32 %v567, 0.0
    %v594 = vmax.f32 %v570, 0.0
    %v595 = vmax.f32 %v575, 0.0
    %v596 = vmax.f32 %v578, 0.0
    %597 = vst [vmem:[#allocation2] sm:$0xff] %v581
    %598 = vst [vmem:[#allocation2 + $0x8] sm:$0xff] %v582
    %599 = vst [vmem:[#allocation2 + $0x10] sm:$0xff] %v583
    %600 = vst [vmem:[#allocation2 + $0x18] sm:$0xff] %v584
    %601 = vst [vmem:[#allocation2 + $0x20] sm:$0xff] %v585
    %602 = vst [vmem:[#allocation2 + $0x28] sm:$0xff] %v586
    %603 = vst [vmem:[#allocation2 + $0x30] sm:$0xff] %v587
    %604 = vst [vmem:[#allocation2 + $0x38] sm:$0xff] %v588
    %605 = vst [vmem:[#allocation2 + $0x40] sm:$0xff] %v589
    %606 = vst [vmem:[#allocation2 + $0x48] sm:$0xff] %v590
    %607 = vst [vmem:[#allocation2 + $0x50] sm:$0xff] %v591
    %608 = vst [vmem:[#allocation2 + $0x58] sm:$0xff] %v592
    %609 = vst [vmem:[#allocation2 + $0x60] sm:$0xff] %v593
    %610 = vst [vmem:[#allocation2 + $0x68] sm:$0xff] %v594
    %611 = vst [vmem:[#allocation2 + $0x70] sm:$0xff] %v595
    %612 = vst [vmem:[#allocation2 + $0x78] sm:$0xff] %v596
    // Predicated region
    $region30: #{tpu_custom_call.1} parent=1 // pred_check
      _
    $region31: #{tpu_custom_call.1} parent=1 // pred_check_branch
      %614 = sbr.rel (0) target = $region33
    $region32: #{tpu_custom_call.1} parent=1 // pred_region
      %s616 = ssub.s32 2048, 2048
      %617 = vsyncadd [#allocation3], %s616
      %s618 = sshll.u32 [#allocation2], 4
      %s619 = int_to_ptr.vmem [resolvable:$true] %s618
      %624 = dma.vmem_to_hbm [thread:$0]  %s619, 2048, %s7, [#allocation3], 128, 128, 8
    $region33: #{tpu_custom_call.1} parent=1 // pred_fallthru
      _
    // Predicated region
    $region34: #{tpu_custom_call.1} parent=1 // pred_check
      _
    $region35: #{tpu_custom_call.1} parent=1 // pred_check_branch
      %626 = sbr.rel (0) target = $region37
    $region36: #{tpu_custom_call.1} parent=1 // pred_region
      %627 = dma.done [#allocation3], 2048
    $region37: #{tpu_custom_call.1} parent=1 // pred_fallthru
      _
    %628 = vsyncpa [#allocation3], 1

</llo_original>
